<compile_context>
chip_gen: v5e
topology: v5e:2x2
jax: 0.10.0
libtpu: 0.0.40
codegen_flags: <defaults>
</compile_context>

<pallas_src>
import functools

import jax
import jax.numpy as jnp
from jax import lax
from jax.experimental import pallas as pl
from jax.experimental.pallas import tpu as pltpu

LANE = 128          # TPU lane width
NEG = -1e30         # softmax padding logit (exp -> 0 exactly in f32)


# --------------------------------------------------------------------------
# Prologue: xw = x @ Wi + b  (one MXU-dense matmul over all timesteps)
# --------------------------------------------------------------------------
def input_proj_kernel(x_ref, wi_ref, b_ref, xw_ref):
    """x_ref: [RT, I] chunk of flattened (time*batch) rows; wi_ref: [I, 2*LANE];
    b_ref: [1, 2*LANE] (softmax pad lanes = NEG); xw_ref: [RT, 2*LANE]."""
    xw_ref[...] = (jnp.dot(x_ref[...], wi_ref[...],
                           preferred_element_type=jnp.float32)
                   + b_ref[...])


# --------------------------------------------------------------------------
# Recurrence: T_CHUNK timesteps per grid step
# --------------------------------------------------------------------------
def rnn_recurrence_kernel(xw_ref, h0_ref, wh_ref, logp_ref, hT_ref, h_scr,
                          *, t_chunk, t_total):
    """One grid step == one chunk of `t_chunk` timesteps.

    xw_ref : [T_CHUNK, B_pad, 2*LANE]  precomputed x@Wi + b for this chunk
    h0_ref : [B_pad, LANE]             initial hidden (resident)
    wh_ref : [LANE, 2*LANE]            fused [i2h | i2o] hidden-part weights
    logp_ref:[T_CHUNK, B_pad, LANE]    per-chunk log-softmax output slab
    hT_ref : [B_pad, LANE]             final hidden (resident, written last)
    h_scr  : VMEM [B_pad, LANE]        hidden carried across chunks
    """
    c = pl.program_id(0)
    mask_tail = (t_total % t_chunk) != 0       # static (trace-time) bool

    @pl.when(c == 0)
    def _():
        h_scr[...] = h0_ref[...]

    wh = wh_ref[...]                           # hoisted: resident in vregs

    def step(t, h):
        # Serial critical path: one (8 x 128) @ (128 x 256) matmul + add.
        y = xw_ref[t] + jnp.dot(h, wh, preferred_element_type=jnp.float32)
        logp_ref[t] = y[:, LANE:]              # raw logits; softmax deferred
        new_h = y[:, :LANE]
        if mask_tail:                          # only emitted if T % T_CHUNK != 0
            new_h = jnp.where(c * t_chunk + t < t_total, new_h, h)
        return new_h

    h_last = lax.fori_loop(0, t_chunk, step, h_scr[...], unroll=True)
    h_scr[...] = h_last

    # Deferred, batched stable log-softmax over the whole chunk slab
    # (off the serial recurrence; one coalesced writeback of the slab).
    logits = logp_ref[...]                                    # [TC, B_pad, LANE]
    m = jnp.max(logits, axis=-1, keepdims=True)
    shifted = logits - m
    lse = jnp.log(jnp.sum(jnp.exp(shifted), axis=-1, keepdims=True))
    logp_ref[...] = shifted - lse

    @pl.when(c == pl.num_programs(0) - 1)
    def _():
        hT_ref[...] = h_last


# --------------------------------------------------------------------------
# Parameter fusion (PyTorch layout -> lane-dense fused weights)
# --------------------------------------------------------------------------
def fuse_params(w_h, b_h, w_o, b_o, input_size):
    """Split weights by (input, hidden) rows and fuse the two Linears along the
    output dim, padded to lane-dense shapes.

    w_h: [I+H, H], w_o: [I+H, O], b_h: [1,H] or [H], b_o: [1,O] or [O].
    Returns wi: [I, 2*LANE], wh: [LANE, 2*LANE], b: [1, 2*LANE].
    """
    d_in, H = w_h.shape
    O = w_o.shape[1]
    I = input_size
    assert d_in == I + H and H <= LANE and O <= LANE

    wi = jnp.zeros((I, 2 * LANE), jnp.float32)
    wi = wi.at[:, :H].set(w_h[:I])
    wi = wi.at[:, LANE:LANE + O].set(w_o[:I])

    wh = jnp.zeros((LANE, 2 * LANE), jnp.float32)
    wh = wh.at[:H, :H].set(w_h[I:])
    wh = wh.at[:H, LANE:LANE + O].set(w_o[I:])

    b = jnp.zeros((1, 2 * LANE), jnp.float32)
    b = b.at[:, :H].set(jnp.reshape(b_h, (1, H)))
    b = b.at[:, LANE:LANE + O].set(jnp.reshape(b_o, (1, O)))
    b = b.at[:, LANE + O:].set(NEG)            # softmax padding lanes
    return wi, wh, b


# --------------------------------------------------------------------------
# Wrappers
# --------------------------------------------------------------------------
def rnn_forward_seq(x_seq, h0, wi, wh, b, hidden_size, output_size, t_chunk=8):
    """Run T recurrent steps: x_seq [T,B,I], h0 [B,H]
    -> (log_probs [T,B,O], final hidden [B,H])."""
    T, B, I = x_seq.shape
    H, O = hidden_size, output_size
    B_pad = max(8, ((B + 7) // 8) * 8)         # sublane-aligned batch
    TC = max(1, min(t_chunk, T))               # timesteps per grid step
    n_chunks = pl.cdiv(T, TC)
    T_pad = n_chunks * TC

    x_p = jnp.zeros((T_pad, B_pad, I), jnp.float32).at[:T, :B, :].set(x_seq)
    h0_p = jnp.zeros((B_pad, LANE), jnp.float32).at[:B, :H].set(h0)

    # ---- Prologue: xw = x @ Wi + b over all timesteps (MXU-dense) --------
    M = T_pad * B_pad
    RT = TC * B_pad                            # rows per grid step (mult. of 8)
    x_flat = x_p.reshape(M, I)
    xw_flat = pl.pallas_call(
        input_proj_kernel,
        out_shape=jax.ShapeDtypeStruct((M, 2 * LANE), jnp.float32),
        grid=(n_chunks,),
        in_specs=[
            pl.BlockSpec((RT, I), lambda c: (c, 0)),
            pl.BlockSpec((I, 2 * LANE), lambda c: (0, 0)),
            pl.BlockSpec((1, 2 * LANE), lambda c: (0, 0)),
        ],
        out_specs=pl.BlockSpec((RT, 2 * LANE), lambda c: (c, 0)),
        compiler_params=pltpu.CompilerParams(
            dimension_semantics=("parallel",)),
    )(x_flat, wi, b)
    xw = xw_flat.reshape(T_pad, B_pad, 2 * LANE)

    # ---- Recurrence: TC timesteps per grid step --------------------------
    kernel = functools.partial(rnn_recurrence_kernel, t_chunk=TC, t_total=T)
    logp_p, hT_p = pl.pallas_call(
        kernel,
        out_shape=(
            jax.ShapeDtypeStruct((T_pad, B_pad, LANE), jnp.float32),
            jax.ShapeDtypeStruct((B_pad, LANE), jnp.float32),
        ),
        grid=(n_chunks,),
        in_specs=[
            pl.BlockSpec((TC, B_pad, 2 * LANE), lambda c: (c, 0, 0)),  # xw chunk
            pl.BlockSpec((B_pad, LANE), lambda c: (0, 0)),             # h0
            pl.BlockSpec((LANE, 2 * LANE), lambda c: (0, 0)),          # wh
        ],
        out_specs=(
            pl.BlockSpec((TC, B_pad, LANE), lambda c: (c, 0, 0)),      # log-probs
            pl.BlockSpec((B_pad, LANE), lambda c: (0, 0)),             # final h
        ),
        scratch_shapes=[pltpu.VMEM((B_pad, LANE), jnp.float32)],       # carried h
        compiler_params=pltpu.CompilerParams(
            dimension_semantics=("arbitrary",)),                       # serial time
    )(xw, h0_p, wh)

    return logp_p[:T, :B, :O], hT_p[:B, :H]


def rnn_forward(inp, hidden, wi, wh, b, hidden_size, output_size):
    """Single RNN-cell step (matches the PyTorch module's forward)."""
    logp, h_new = rnn_forward_seq(inp[None], hidden, wi, wh, b,
                                  hidden_size, output_size, t_chunk=1)
    return logp[0], h_new


def init_params(key, input_size, hidden_size, output_size):
    # Deterministic init mimicking nn.Linear: U(-1/sqrt(fan_in), 1/sqrt(fan_in)).
    d_in = input_size + hidden_size
    k1, k2, k3, k4 = jax.random.split(key, 4)
    bound = 1.0 / jnp.sqrt(d_in)
    w_h = jax.random.uniform(k1, (d_in, hidden_size), jnp.float32, -bound, bound)
    b_h = jax.random.uniform(k2, (1, hidden_size), jnp.float32, -bound, bound)
    w_o = jax.random.uniform(k3, (d_in, output_size), jnp.float32, -bound, bound)
    b_o = jax.random.uniform(k4, (1, output_size), jnp.float32, -bound, bound)
    return w_h, b_h, w_o, b_o


if __name__ == "__main__":
    input_size, hidden_size, output_size = 32, 32, 16
    batch, seq_len = 2, 8

    key = jax.random.PRNGKey(0)
    k_in, k_p = jax.random.split(key)

    x_seq = jax.random.normal(k_in, (seq_len, batch, input_size), jnp.float32)
    h0 = jnp.zeros((batch, hidden_size), jnp.float32)       # initHidden()
    w_h, b_h, w_o, b_o = init_params(k_p, input_size, hidden_size, output_size)
    wi, wh, b = fuse_params(w_h, b_h, w_o, b_o, input_size)

    # Single-step forward (exact PyTorch module semantics).
    logp1, h1 = rnn_forward(x_seq[0], h0, wi, wh, b, hidden_size, output_size)
    # Multi-step forward (time loop chunked inside the kernel).
    logps, hT = rnn_forward_seq(x_seq, h0, wi, wh, b, hidden_size, output_size)
    jax.block_until_ready((logp1, h1, logps, hT))

    # --- Checks ---------------------------------------------------------
    def ref_step(x, h):
        comb = jnp.concatenate([x, h], axis=1)
        h_new = comb @ w_h + jnp.reshape(b_h, (1, -1))
        out = jax.nn.log_softmax(comb @ w_o + jnp.reshape(b_o, (1, -1)), axis=1)
        return out, h_new

    # 1) Single step vs pure-JAX reference.
    ref_out1, ref_h1 = ref_step(x_seq[0], h0)
    assert jnp.allclose(logp1, ref_out1, atol=1e-5), "single-step output mismatch"
    assert jnp.allclose(h1, ref_h1, atol=1e-5), "single-step hidden mismatch"

    # 2) Chunked multi-step kernel vs repeated single-step kernel.
    h_step = h0
    step_outs = []
    for t in range(seq_len):
        out_t, h_step = rnn_forward(x_seq[t], h_step, wi, wh, b,
                                    hidden_size, output_size)
        step_outs.append(out_t)
    step_outs = jnp.stack(step_outs)
    assert jnp.allclose(logps, step_outs, atol=1e-5), "seq vs stepped output mismatch"
    assert jnp.allclose(hT, h_step, atol=1e-5), "seq vs stepped hidden mismatch"

    # 3) Multi-step kernel vs pure-JAX recurrence (loose tolerance: TPU's
    #    default f32 MXU precision can drift slightly through the recurrence
    #    between XLA and Mosaic lowerings).
    h_ref = h0
    for t in range(seq_len):
        ref_out, h_ref = ref_step(x_seq[t], h_ref)
        assert jnp.allclose(logps[t], ref_out, atol=1e-2), "seq output mismatch"
    assert jnp.allclose(hT, h_ref, atol=1e-2), "seq hidden mismatch"

    print("KERNEL_OK")
</pallas_src>

<mosaic_0001>
module attributes {stable_mosaic.version = 11 : i64} {
  func.func @input_proj_kernel(%arg0: i32, %arg1: memref<8x32xf32, #tpu.memory_space<vmem>>, %arg2: memref<32x256xf32, #tpu.memory_space<vmem>>, %arg3: memref<1x256xf32, #tpu.memory_space<vmem>>, %arg4: memref<8x256xf32, #tpu.memory_space<vmem>>) attributes {dimension_semantics = [#tpu.dimension_semantics<parallel>], iteration_bounds = array<i64: 1>, scalar_prefetch = 0 : i64, scratch_operands = 0 : i64, tpu.core_type = #tpu.core_type<tc>, window_params = [{transform_indices = @transform_0, window_bounds = array<i64: 8, 32>}, {pipeline_mode = #tpu.pipeline_mode<synchronous>, transform_indices = @transform_1, window_bounds = array<i64: 32, 256>}, {pipeline_mode = #tpu.pipeline_mode<synchronous>, transform_indices = @transform_2, window_bounds = array<i64: 1, 256>}, {transform_indices = @transform_3, window_bounds = array<i64: 8, 256>}]} {
    %c0 = arith.constant 0 : index
    %c0_0 = arith.constant 0 : index
    %0 = vector.load %arg1[%c0, %c0_0] : memref<8x32xf32, #tpu.memory_space<vmem>>, vector<8x32xf32>
    %c0_1 = arith.constant 0 : index
    %c0_2 = arith.constant 0 : index
    %1 = vector.load %arg2[%c0_1, %c0_2] : memref<32x256xf32, #tpu.memory_space<vmem>>, vector<32x256xf32>
    %cst = arith.constant dense<0.000000e+00> : vector<8x256xf32>
    %2 = tpu.matmul %0, %1, %cst {dimension_numbers = #tpu.dot_dimension_numbers<[1], [0], [0], [1], [0, 0, 1, 1], [], []>} : vector<8x32xf32>, vector<32x256xf32>, vector<8x256xf32> -> vector<8x256xf32>
    %c0_3 = arith.constant 0 : index
    %c0_4 = arith.constant 0 : index
    %3 = vector.load %arg3[%c0_3, %c0_4] : memref<1x256xf32, #tpu.memory_space<vmem>>, vector<1x256xf32>
    %4 = vector.broadcast %3 : vector<1x256xf32> to vector<8x256xf32>
    %5 = arith.addf %2, %4 : vector<8x256xf32>
    %c0_5 = arith.constant 0 : index
    %c0_6 = arith.constant 0 : index
    %6 = vector.load %arg4[%c0_5, %c0_6] : memref<8x256xf32, #tpu.memory_space<vmem>>, vector<8x256xf32>
    tpu.vector_store %arg4[%c0_5, %c0_6], %5 {strides = array<i32>} : memref<8x256xf32, #tpu.memory_space<vmem>>, vector<8x256xf32>,
    return
  }
  func.func @transform_0(%arg0: i32) -> (i32, i32) {
    %c0_i32 = arith.constant 0 : i32
    %c0_i32_0 = arith.constant 0 : i32
    return %arg0, %c0_i32 : i32, i32
  }
  func.func @transform_1(%arg0: i32) -> (i32, i32) {
    %c0_i32 = arith.constant 0 : i32
    %c0_i32_0 = arith.constant 0 : i32
    %c0_i32_1 = arith.constant 0 : i32
    return %c0_i32, %c0_i32_0 : i32, i32
  }
  func.func @transform_2(%arg0: i32) -> (i32, i32) {
    %c0_i32 = arith.constant 0 : i32
    %c0_i32_0 = arith.constant 0 : i32
    %c0_i32_1 = arith.constant 0 : i32
    return %c0_i32, %c0_i32_0 : i32, i32
  }
  func.func @transform_3(%arg0: i32) -> (i32, i32) {
    %c0_i32 = arith.constant 0 : i32
    %c0_i32_0 = arith.constant 0 : i32
    return %arg0, %c0_i32 : i32, i32
  }
}

</mosaic_0001>

<llo_original>
// kernel: tpu_custom_call.1
$region0: #{tpu_custom_call.1}
  #allocation0 [shape = 'u32[]', space=smem, size = 0x4, offset = 0x4, fixed_abs, tag = 'smem constant byte address 0x4 - core index']
  #allocation1 [shape = 'u32[72,128]{1,0:T(1,128)}', space=vmem, size = 0x9000, scoped, tag = 'internal scratch']
  %s0 = inlined_call_operand.hbm [shape: f32[8,32], index: 0, kind: input, shape index: {}]
  %s1 = inlined_call_operand.hbm [shape: f32[32,256], index: 1, kind: input, shape index: {}]
  %s2 = inlined_call_operand.hbm [shape: f32[1,256], index: 2, kind: input, shape index: {}]
  %s3 = inlined_call_operand.hbm [shape: f32[8,256], index: 3, kind: output, shape index: {}]
  %s4 = sld [smem:[#allocation0]]
  $region34: #{tpu_custom_call.1} parent=0
    _
  %s6 = ssub.s32 1, %s4
  %s7 = scalar_select 0, %s6, %s4
  $region1: #{tpu_custom_call.1} parent=0
    #allocation2 [shape = 'u8[4096]{0}', space=vmem, size = 0x1000, scoped, tag = 'input window, operand 0, single buffered']
    #allocation3 [shape = 's32[1]{0}', space=sflag, size = 0x4, scoped, tag = 'scoped memory for tpu_custom_call.1']
    #allocation4 [shape = 's32[1]{0}', space=sflag, size = 0x4, scoped, tag = 'scoped memory for tpu_custom_call.1']
    #allocation5 [shape = 'u8[32768]{0}', space=vmem, size = 0x8000, scoped, tag = 'input window, operand 1, single buffered']
    #allocation6 [shape = 's32[1]{0}', space=sflag, size = 0x4, scoped, tag = 'scoped memory for tpu_custom_call.1']
    #allocation7 [shape = 'u8[1024]{0}', space=vmem, size = 0x400, scoped, tag = 'input window, operand 2, single buffered']
    #allocation8 [shape = 'u8[8192]{0}', space=vmem, size = 0x2000, scoped, tag = 'output window, operand 0, single buffered']
    %8 = vsyncpa [#allocation3], 0
    %9 = vsyncpa [#allocation6], 0
    %10 = vsyncpa [#allocation4], 0
    // Predicated region
    $region2: #{tpu_custom_call.1} parent=1 // pred_check
      _
    $region3: #{tpu_custom_call.1} parent=1 // pred_check_branch
      %12 = sbr.rel (0) target = $region5
    $region4: #{tpu_custom_call.1} parent=1 // pred_region
      %14 = vsyncadd [#allocation3], 0
      %s16 = sshll.u32 %s0, 4
      %s17 = int_to_ptr.hbm [resolvable:$true] %s16
      %s18 = sshll.u32 [#allocation2], 4
      %s19 = int_to_ptr.vmem [resolvable:$true] %s18
      %21 = dma.hbm_to_vmem [thread:$0]  %s17, 128, %s19, [#allocation3]
    $region5: #{tpu_custom_call.1} parent=1 // pred_fallthru
      _
    // Predicated region
    $region6: #{tpu_custom_call.1} parent=1 // pred_check
      _
    $region7: #{tpu_custom_call.1} parent=1 // pred_check_branch
      %23 = sbr.rel (0) target = $region9
    $region8: #{tpu_custom_call.1} parent=1 // pred_region
      %25 = vsyncadd [#allocation6], 0
      %s26 = sshll.u32 %s1, 4
      %s27 = int_to_ptr.hbm [resolvable:$true] %s26
      %s28 = sshll.u32 [#allocation5], 4
      %s29 = int_to_ptr.vmem [resolvable:$true] %s28
      %34 = dma.hbm_to_vmem [thread:$0]  %s27, 1024, %s29, [#allocation6], 256, 256, 16
    $region9: #{tpu_custom_call.1} parent=1 // pred_fallthru
      _
    // Predicated region
    $region10: #{tpu_custom_call.1} parent=1 // pred_check
      _
    $region11: #{tpu_custom_call.1} parent=1 // pred_check_branch
      %36 = sbr.rel (0) target = $region13
    $region12: #{tpu_custom_call.1} parent=1 // pred_region
      %38 = vsyncadd [#allocation6], 0
      %s40 = sshll.u32 %s2, 4
      %s41 = int_to_ptr.hbm [resolvable:$true] %s40
      %s42 = sshll.u32 [#allocation7], 4
      %s43 = int_to_ptr.vmem [resolvable:$true] %s42
      %45 = dma.hbm_to_vmem [thread:$0]  %s41, 32, %s43, [#allocation6]
    $region13: #{tpu_custom_call.1} parent=1 // pred_fallthru
      _
    // Predicated region
    $region14: #{tpu_custom_call.1} parent=1 // pred_check
      _
    $region15: #{tpu_custom_call.1} parent=1 // pred_check_branch
      %47 = sbr.rel (0) target = $region17
    $region16: #{tpu_custom_call.1} parent=1 // pred_region
      %49 = dma.done [#allocation3], 128
    $region17: #{tpu_custom_call.1} parent=1 // pred_fallthru
      _
    // Predicated region
    $region18: #{tpu_custom_call.1} parent=1 // pred_check
      _
    $region19: #{tpu_custom_call.1} parent=1 // pred_check_branch
      %51 = sbr.rel (0) target = $region21
    $region20: #{tpu_custom_call.1} parent=1 // pred_region
      %53 = dma.done [#allocation6], 1024
    $region21: #{tpu_custom_call.1} parent=1 // pred_fallthru
      _
    // Predicated region
    $region22: #{tpu_custom_call.1} parent=1 // pred_check
      _
    $region23: #{tpu_custom_call.1} parent=1 // pred_check_branch
      %55 = sbr.rel (0) target = $region25
    $region24: #{tpu_custom_call.1} parent=1 // pred_region
      %57 = dma.done [#allocation6], 32
    $region25: #{tpu_custom_call.1} parent=1 // pred_fallthru
      _
    %v58 = vld [vmem:[#allocation2] sm:$0xff]
    %v59 = vld [vmem:[#allocation5] sm:$0xff]
    %v60 = vld [vmem:[#allocation5 + $0x8] sm:$0xff]
    %v61 = vld [vmem:[#allocation5 + $0x10] sm:$0xff]
    %v62 = vld [vmem:[#allocation5 + $0x18] sm:$0xff]
    %v63 = vld [vmem:[#allocation5 + $0x20] sm:$0xff]
    %v64 = vld [vmem:[#allocation5 + $0x28] sm:$0xff]
    %v65 = vld [vmem:[#allocation5 + $0x30] sm:$0xff]
    %v66 = vld [vmem:[#allocation5 + $0x38] sm:$0xff]
    %v67 = vld [vmem:[#allocation7] sm:$0x3]
    %v69 = vperm.slane %v67, 0
    %v70 = vperm.slane %v67, 1
    %vm73 = vcmask 261120
    %v75 = vsel %vm73, %v58, 0
    %77 = vmatpush.msra.mxu0 0.0
    %78 = vmatpush.msra.mxu0 0.0
    %79 = vmatpush.msra.mxu0 0.0
    %80 = vmatpush.msra.mxu0 0.0
    %81 = vmatpush.msra.mxu0 0.0
    %82 = vmatpush.msra.mxu0 0.0
    %83 = vmatpush.msra.mxu0 0.0
    %84 = vmatpush.msra.mxu0 0.0
    %85 = vmatpush.msra.mxu0 0.0
    %86 = vmatpush.msra.mxu0 0.0
    %87 = vmatpush.msra.mxu0 0.0
    %88 = vmatpush.msra.mxu0 0.0
    %89 = vmatpush.msra.mxu0 %v65
    %90 = vmatpush.msra.mxu0 %v63
    %91 = vmatpush.msra.mxu0 %v61
    %92 = vmatpush.msra.mxu0 %v59
    %93 = vmatmul.f32.gmra.mxu0 %v75
    %v94 = vpop.f32.mrf.mxu0
    %v95 = vadd.f32 %v69, %v94
    %96 = vdwg.mxu0
    %97 = vmatpush.msra.mxu0 0.0
    %98 = vmatpush.msra.mxu0 0.0
    %99 = vmatpush.msra.mxu0 0.0
    %100 = vmatpush.msra.mxu0 0.0
    %101 = vmatpush.msra.mxu0 0.0
    %102 = vmatpush.msra.mxu0 0.0
    %103 = vmatpush.msra.mxu0 0.0
    %104 = vmatpush.msra.mxu0 0.0
    %105 = vmatpush.msra.mxu0 0.0
    %106 = vmatpush.msra.mxu0 0.0
    %107 = vmatpush.msra.mxu0 0.0
    %108 = vmatpush.msra.mxu0 0.0
    %109 = vmatpush.msra.mxu0 %v66
    %110 = vmatpush.msra.mxu0 %v64
    %111 = vmatpush.msra.mxu0 %v62
    %112 = vmatpush.msra.mxu0 %v60
    %113 = vmatmul.f32.gmra.mxu0 %v75
    %v114 = vpop.f32.mrf.mxu0
    %v115 = vadd.f32 %v70, %v114
    %116 = vdwg.mxu0
    %117 = vst [vmem:[#allocation8] sm:$0xff] %v95
    %118 = vst [vmem:[#allocation8 + $0x8] sm:$0xff] %v115
    // Predicated region
    $region26: #{tpu_custom_call.1} parent=1 // pred_check
      _
    $region27: #{tpu_custom_call.1} parent=1 // pred_check_branch
      %120 = sbr.rel (0) target = $region29
    $region28: #{tpu_custom_call.1} parent=1 // pred_region
      %122 = vsyncadd [#allocation4], 0
      %s124 = sshll.u32 [#allocation8], 4
      %s125 = int_to_ptr.vmem [resolvable:$true] %s124
      %s126 = sshll.u32 %s3, 4
      %s127 = int_to_ptr.hbm [resolvable:$true] %s126
      %129 = dma.vmem_to_hbm [thread:$0]  %s125, 256, %s127, [#allocation4]
    $region29: #{tpu_custom_call.1} parent=1 // pred_fallthru
      _
    // Predicated region
    $region30: #{tpu_custom_call.1} parent=1 // pred_check
      _
    $region31: #{tpu_custom_call.1} parent=1 // pred_check_branch
      %131 = sbr.rel (0) target = $region33
    $region32: #{tpu_custom_call.1} parent=1 // pred_region
      %133 = dma.done [#allocation4], 256
    $region33: #{tpu_custom_call.1} parent=1 // pred_fallthru
      _
    %134 = vsyncpa [#allocation3], 1
    %135 = vsyncpa [#allocation6], 1
    %136 = vsyncpa [#allocation4], 1

</llo_original>
